<compile_context>
chip_gen: v5e
topology: v5e:2x2
jax: 0.10.0
libtpu: 0.0.40
codegen_flags: <defaults>
</compile_context>

<pallas_src>
import numpy as np
import jax
import jax.numpy as jnp
from jax.experimental import pallas as pl
from jax.experimental.pallas import tpu as pltpu

# ----------------------------------------------------------------------------
# GlobalGlance config (module defaults are repeat_time=10, patch 64x64; same
# math at small, example-friendly sizes).
# ----------------------------------------------------------------------------
KERNEL_SIZE = 4
STRIDE = 4            # == KERNEL_SIZE (module default); reshape im2col relies on it
REPEAT_TIME = 2
PATCH_H = 8
PATCH_W = 8
SIGMA = 1.5
PAD = (KERNEL_SIZE - 1) // 2
KK = KERNEL_SIZE * KERNEL_SIZE

# SSIM constants for dynamic range L = 255 (inputs are clip(x,0,1)*255)
C1 = (0.01 * 255.0) ** 2
C2 = (0.03 * 255.0) ** 2

LANES = 128
TILE_TARGET = 8192    # lanes per kernel tile: 2 inputs x 2 bufs x 16*8192*4B = 2 MiB
NSPLIT = 2            # always 2-way core split (megacore on v7x; no-op v5e/v6e)


def _gaussian_window():
    x = np.arange(KERNEL_SIZE, dtype=np.float64)
    g = np.exp(-((x - KERNEL_SIZE // 2) ** 2) / (2.0 * SIGMA ** 2))
    g = g / g.sum()
    w2d = np.outer(g, g)                                  # (K, K), sums to 1
    return np.asarray(w2d.reshape(KK, 1), dtype=np.float32)


_W_NP = _gaussian_window()                                # (KK, 1) numpy constant


# ----------------------------------------------------------------------------
# Pallas kernel: fused depthwise-conv (weighted window sums) + SSIM map + sum.
# x/y tiles are (KK, tile): window taps on sublanes, conv positions on lanes.
# ----------------------------------------------------------------------------
def _make_ssim_kernel(m_true, tile):

    def kernel(w_ref, x_ref, y_ref, o_ref, acc_ref):
        s = pl.program_id(0)                 # core-split axis ("parallel")
        t = pl.program_id(1)                 # lane-tile axis ("arbitrary")
        nt = pl.num_programs(1)

        @pl.when(t == 0)
        def _init():
            acc_ref[...] = jnp.zeros_like(acc_ref)
            o_ref[...] = jnp.zeros_like(o_ref)

        x = x_ref[...]                       # (KK, tile) f32
        y = y_ref[...]
        w = w_ref[...]                       # (KK, 1): lane-broadcasts in the muls

        # Product reuse: 5 (KK, tile) VPU multiplies instead of 8.
        xw = x * w
        yw = y * w
        mu1 = jnp.sum(xw, axis=0, keepdims=True)                    # (1, tile)
        mu2 = jnp.sum(yw, axis=0, keepdims=True)
        s11 = jnp.sum(x * xw, axis=0, keepdims=True) - mu1 * mu1
        s22 = jnp.sum(y * yw, axis=0, keepdims=True) - mu2 * mu2
        s12 = jnp.sum(y * xw, axis=0, keepdims=True) - mu1 * mu2

        num = (2.0 * mu1 * mu2 + C1) * (2.0 * s12 + C2)
        den = (mu1 * mu1 + mu2 * mu2 + C1) * (s11 + s22 + C2)
        # Exact reciprocal keeps module numerics (approx=True would be ~1e-3 rel).
        ssim_map = num * pl.reciprocal(den, approx=False)            # (1, tile)

        gstart = (s * nt + t) * tile
        needs_mask = gstart + tile > m_true

        # Mask lane-padding columns only on tiles that actually contain padding.
        @pl.when(needs_mask)
        def _acc_masked():
            col = gstart + jax.lax.broadcasted_iota(jnp.int32, ssim_map.shape, 1)
            acc_ref[...] += jnp.where(col < m_true, ssim_map, 0.0)

        @pl.when(jnp.logical_not(needs_mask))
        def _acc():
            acc_ref[...] += ssim_map

        # Single cross-lane reduction + output write per split.
        @pl.when(t == nt - 1)
        def _finalize():
            tot = jnp.sum(acc_ref[...], axis=1, keepdims=True)       # (1, 1)
            o_ref[...] = jnp.broadcast_to(tot, o_ref.shape)

    return kernel


# ----------------------------------------------------------------------------
# Plain-JAX glue (layout only)
# ----------------------------------------------------------------------------
def _im2col_cols(x):
    """x: (B, C, n, Hh, Ww) SSIM input -> (KK, B*C*n*OH*OW) patch columns for a
    depthwise conv with stride=STRIDE, pad=PAD.  Pure pad+crop+reshape, valid
    because STRIDE == KERNEL_SIZE (non-overlapping windows)."""
    assert STRIDE == KERNEL_SIZE
    B, C, n, Hh, Ww = x.shape
    OH = (Hh + 2 * PAD - KERNEL_SIZE) // STRIDE + 1
    OW = (Ww + 2 * PAD - KERNEL_SIZE) // STRIDE + 1
    xp = jnp.pad(x, ((0, 0), (0, 0), (0, 0), (PAD, PAD), (PAD, PAD)))
    xp = xp[..., :OH * KERNEL_SIZE, :OW * KERNEL_SIZE]
    p = xp.reshape(B, C, n, OH, KERNEL_SIZE, OW, KERNEL_SIZE)
    p = jnp.transpose(p, (4, 6, 0, 1, 2, 3, 5))       # (kh, kw, B, C, n, OH, OW)
    return p.reshape(KK, -1)


def global_glance_loss(src_vec, tar_vec, perm_key):
    """src_vec / tar_vec: (B, C, H, W) float, NCHW (same as the PyTorch module)."""
    B, C, H, W = src_vec.shape
    HW = H * W
    assert HW % (PATCH_H * PATCH_W) == 0
    n_patch = HW // (PATCH_H * PATCH_W)

    src_vec = src_vec.astype(jnp.float32)
    tar_vec = tar_vec.astype(jnp.float32)

    # Per-batch index list: [arange] + [randperm]*(repeat_time-1), batched over B.
    base = jnp.broadcast_to(jnp.arange(HW, dtype=jnp.int32)[None, None, :],
                            (B, 1, HW))
    if REPEAT_TIME > 1:
        keys = jax.random.split(perm_key, B * (REPEAT_TIME - 1))
        perms = jax.vmap(
            lambda k: jax.random.permutation(k, HW).astype(jnp.int32))(keys)
        perms = perms.reshape(B, REPEAT_TIME - 1, HW)
        idx = jnp.concatenate([base, perms], axis=1)
    else:
        idx = base
    idx = idx.reshape(B, REPEAT_TIME * HW)

    def gather(img):
        flat = img.reshape(B, C, HW)
        gidx = jnp.broadcast_to(idx[:, None, :], (B, C, REPEAT_TIME * HW))
        g = jnp.take_along_axis(flat, gidx, axis=2)
        g = g.reshape(B, C, n_patch, PATCH_H, PATCH_W * REPEAT_TIME)
        return jnp.clip(g, 0.0, 1.0) * 255.0

    src_cols = _im2col_cols(gather(src_vec))          # (KK, M) f32, lane-dense
    tar_cols = _im2col_cols(gather(tar_vec))
    M = src_cols.shape[1]

    # Lane-dense tiling: big tiles, tile count padded to an even number so the
    # 2-way "parallel" split always engages (v7x megacore; harmless elsewhere).
    m128 = pl.cdiv(M, LANES) * LANES
    tile = min(TILE_TARGET, m128)
    num_tiles = pl.cdiv(M, tile)
    num_tiles = pl.cdiv(num_tiles, NSPLIT) * NSPLIT
    tiles_per_split = num_tiles // NSPLIT
    m_pad = num_tiles * tile

    if m_pad != M:
        pad = ((0, 0), (0, m_pad - M))
        src_cols = jnp.pad(src_cols, pad)
        tar_cols = jnp.pad(tar_cols, pad)

    w_col = jnp.asarray(_W_NP)                        # (KK, 1) kernel input

    w_spec = pl.BlockSpec((KK, 1), lambda s, t: (0, 0))
    in_spec = pl.BlockSpec((KK, tile),
                           lambda s, t: (0, s * tiles_per_split + t))
    out_spec = pl.BlockSpec((8, LANES), lambda s, t: (s, 0))

    partial = pl.pallas_call(
        _make_ssim_kernel(M, tile),
        out_shape=jax.ShapeDtypeStruct((NSPLIT * 8, LANES), jnp.float32),
        grid=(NSPLIT, tiles_per_split),
        in_specs=[w_spec, in_spec, in_spec],
        out_specs=out_spec,
        scratch_shapes=[pltpu.VMEM((1, tile), jnp.float32)],
        compiler_params=pltpu.CompilerParams(
            dimension_semantics=("parallel", "arbitrary"),
            vmem_limit_bytes=32 * 1024 * 1024),
    )(w_col, src_cols, tar_cols)

    total = jnp.sum(partial.reshape(NSPLIT, 8, LANES)[:, 0, 0])
    mean_ssim = total / float(M)

    # Each batch contributes the same number of SSIM-map elements, so
    # mean_b (1 - mean_ssim_b) == 1 - global mean over all elements.
    return 1.0 - mean_ssim


if __name__ == "__main__":
    key = jax.random.PRNGKey(0)
    k_src, k_tar, k_perm = jax.random.split(key, 3)

    B, C, H, W = 2, 4, 16, 16
    src = jax.random.uniform(k_src, (B, C, H, W), dtype=jnp.float32)
    tar = jax.random.uniform(k_tar, (B, C, H, W), dtype=jnp.float32)

    loss = jax.jit(global_glance_loss)(src, tar, k_perm)
    jax.block_until_ready(loss)
    print("KERNEL_OK")
</pallas_src>

<mosaic_0001>
module attributes {stable_mosaic.version = 11 : i64} {
  func.func @kernel(%arg0: i32, %arg1: i32, %arg2: memref<16x1xf32, #tpu.memory_space<vmem>>, %arg3: memref<16x256xf32, #tpu.memory_space<vmem>>, %arg4: memref<16x256xf32, #tpu.memory_space<vmem>>, %arg5: memref<8x128xf32, #tpu.memory_space<vmem>>, %arg6: memref<1x256xf32, #tpu.memory_space<vmem>>) attributes {dimension_semantics = [#tpu.dimension_semantics<parallel>, #tpu.dimension_semantics<arbitrary>], iteration_bounds = array<i64: 2, 1>, scalar_prefetch = 0 : i64, scratch_operands = 1 : i64, tpu.core_type = #tpu.core_type<tc>, window_params = [{pipeline_mode = #tpu.pipeline_mode<synchronous>, transform_indices = @transform_0, window_bounds = array<i64: 16, 1>}, {transform_indices = @transform_1, window_bounds = array<i64: 16, 256>}, {transform_indices = @transform_2, window_bounds = array<i64: 16, 256>}, {transform_indices = @transform_3, window_bounds = array<i64: 8, 128>}]} {
    %c0_i32 = arith.constant 0 : i32
    %0 = arith.cmpi eq, %arg1, %c0_i32 : i32
    %1 = arith.extui %0 : i1 to i32
    %c0_i32_0 = arith.constant 0 : i32
    %2 = arith.cmpi ne, %1, %c0_i32_0 : i32
    scf.if %2 {
      %cst_22 = arith.constant 0.000000e+00 : f32
      %63 = vector.broadcast %cst_22 : f32 to vector<1x256xf32>
      %c0_23 = arith.constant 0 : index
      %c0_24 = arith.constant 0 : index
      %64 = vector.load %arg6[%c0_23, %c0_24] : memref<1x256xf32, #tpu.memory_space<vmem>>, vector<1x256xf32>
      tpu.vector_store %arg6[%c0_23, %c0_24], %63 {strides = array<i32>} : memref<1x256xf32, #tpu.memory_space<vmem>>, vector<1x256xf32>,
      %cst_25 = arith.constant 0.000000e+00 : f32
      %65 = vector.broadcast %cst_25 : f32 to vector<8x128xf32>
      %c0_26 = arith.constant 0 : index
      %c0_27 = arith.constant 0 : index
      %66 = vector.load %arg5[%c0_26, %c0_27] : memref<8x128xf32, #tpu.memory_space<vmem>>, vector<8x128xf32>
      tpu.vector_store %arg5[%c0_26, %c0_27], %65 {strides = array<i32>} : memref<8x128xf32, #tpu.memory_space<vmem>>, vector<8x128xf32>,
    } else {
    }
    %c0 = arith.constant 0 : index
    %c0_1 = arith.constant 0 : index
    %3 = vector.load %arg3[%c0, %c0_1] : memref<16x256xf32, #tpu.memory_space<vmem>>, vector<16x256xf32>
    %c0_2 = arith.constant 0 : index
    %c0_3 = arith.constant 0 : index
    %4 = vector.load %arg4[%c0_2, %c0_3] : memref<16x256xf32, #tpu.memory_space<vmem>>, vector<16x256xf32>
    %c0_4 = arith.constant 0 : index
    %c0_5 = arith.constant 0 : index
    %5 = vector.load %arg2[%c0_4, %c0_5] : memref<16x1xf32, #tpu.memory_space<vmem>>, vector<16x1xf32>
    %6 = vector.broadcast %5 : vector<16x1xf32> to vector<16x256xf32>
    %7 = arith.mulf %3, %6 : vector<16x256xf32>
    %8 = vector.broadcast %5 : vector<16x1xf32> to vector<16x256xf32>
    %9 = arith.mulf %4, %8 : vector<16x256xf32>
    %cst = arith.constant dense<0.000000e+00> : vector<256xf32>
    %10 = vector.multi_reduction <add>, %7, %cst [0] : vector<16x256xf32> to vector<256xf32>
    %11 = vector.shape_cast %10 : vector<256xf32> to vector<1x256xf32>
    %cst_6 = arith.constant dense<0.000000e+00> : vector<256xf32>
    %12 = vector.multi_reduction <add>, %9, %cst_6 [0] : vector<16x256xf32> to vector<256xf32>
    %13 = vector.shape_cast %12 : vector<256xf32> to vector<1x256xf32>
    %14 = arith.mulf %3, %7 : vector<16x256xf32>
    %cst_7 = arith.constant dense<0.000000e+00> : vector<256xf32>
    %15 = vector.multi_reduction <add>, %14, %cst_7 [0] : vector<16x256xf32> to vector<256xf32>
    %16 = vector.shape_cast %15 : vector<256xf32> to vector<1x256xf32>
    %17 = arith.mulf %11, %11 : vector<1x256xf32>
    %18 = arith.subf %16, %17 : vector<1x256xf32>
    %19 = arith.mulf %4, %9 : vector<16x256xf32>
    %cst_8 = arith.constant dense<0.000000e+00> : vector<256xf32>
    %20 = vector.multi_reduction <add>, %19, %cst_8 [0] : vector<16x256xf32> to vector<256xf32>
    %21 = vector.shape_cast %20 : vector<256xf32> to vector<1x256xf32>
    %22 = arith.mulf %13, %13 : vector<1x256xf32>
    %23 = arith.subf %21, %22 : vector<1x256xf32>
    %24 = arith.mulf %4, %7 : vector<16x256xf32>
    %cst_9 = arith.constant dense<0.000000e+00> : vector<256xf32>
    %25 = vector.multi_reduction <add>, %24, %cst_9 [0] : vector<16x256xf32> to vector<256xf32>
    %26 = vector.shape_cast %25 : vector<256xf32> to vector<1x256xf32>
    %27 = arith.mulf %11, %13 : vector<1x256xf32>
    %28 = arith.subf %26, %27 : vector<1x256xf32>
    %cst_10 = arith.constant 2.000000e+00 : f32
    %29 = vector.broadcast %cst_10 : f32 to vector<1x256xf32>
    %30 = arith.mulf %29, %11 : vector<1x256xf32>
    %31 = arith.mulf %30, %13 : vector<1x256xf32>
    %cst_11 = arith.constant 6.502500e+00 : f32
    %32 = vector.broadcast %cst_11 : f32 to vector<1x256xf32>
    %33 = arith.addf %31, %32 : vector<1x256xf32>
    %cst_12 = arith.constant 2.000000e+00 : f32
    %34 = vector.broadcast %cst_12 : f32 to vector<1x256xf32>
    %35 = arith.mulf %34, %28 : vector<1x256xf32>
    %cst_13 = arith.constant 5.852250e+01 : f32
    %36 = vector.broadcast %cst_13 : f32 to vector<1x256xf32>
    %37 = arith.addf %35, %36 : vector<1x256xf32>
    %38 = arith.mulf %33, %37 : vector<1x256xf32>
    %39 = arith.mulf %11, %11 : vector<1x256xf32>
    %40 = arith.mulf %13, %13 : vector<1x256xf32>
    %41 = arith.addf %39, %40 : vector<1x256xf32>
    %cst_14 = arith.constant 6.502500e+00 : f32
    %42 = vector.broadcast %cst_14 : f32 to vector<1x256xf32>
    %43 = arith.addf %41, %42 : vector<1x256xf32>
    %44 = arith.addf %18, %23 : vector<1x256xf32>
    %cst_15 = arith.constant 5.852250e+01 : f32
    %45 = vector.broadcast %cst_15 : f32 to vector<1x256xf32>
    %46 = arith.addf %44, %45 : vector<1x256xf32>
    %47 = arith.mulf %43, %46 : vector<1x256xf32>
    %48 = tpu.reciprocal %47 : vector<1x256xf32> -> vector<1x256xf32>
    %49 = arith.mulf %38, %48 : vector<1x256xf32>
    %c1_i32 = arith.constant 1 : i32
    %50 = arith.muli %arg0, %c1_i32 : i32
    %51 = arith.addi %50, %arg1 : i32
    %c256_i32 = arith.constant 256 : i32
    %52 = arith.muli %51, %c256_i32 : i32
    %c256_i32_16 = arith.constant 256 : i32
    %53 = arith.addi %52, %c256_i32_16 : i32
    %c256_i32_17 = arith.constant 256 : i32
    %54 = arith.cmpi sgt, %53, %c256_i32_17 : i32
    %55 = arith.extui %54 : i1 to i32
    %c0_i32_18 = arith.constant 0 : i32
    %56 = arith.cmpi ne, %55, %c0_i32_18 : i32
    scf.if %56 {
      %63 = tpu.iota {dimensions = array<i32: 1>} : vector<1x256xi32>
      %64 = vector.broadcast %52 : i32 to vector<1x256xi32>
      %65 = arith.addi %64, %63 : vector<1x256xi32>
      %c0_22 = arith.constant 0 : index
      %c0_23 = arith.constant 0 : index
      %66 = vector.load %arg6[%c0_22, %c0_23] : memref<1x256xf32, #tpu.memory_space<vmem>>, vector<1x256xf32>
      %c256_i32_24 = arith.constant 256 : i32
      %67 = vector.broadcast %c256_i32_24 : i32 to vector<1x256xi32>
      %68 = arith.cmpi slt, %65, %67 : vector<1x256xi32>
      %cst_25 = arith.constant 0.000000e+00 : f32
      %69 = vector.broadcast %cst_25 : f32 to vector<1x256xf32>
      %70 = arith.select %68, %49, %69 : vector<1x256xi1>, vector<1x256xf32>
      %71 = arith.addf %66, %70 : vector<1x256xf32>
      %c0_26 = arith.constant 0 : index
      %c0_27 = arith.constant 0 : index
      %72 = vector.load %arg6[%c0_26, %c0_27] : memref<1x256xf32, #tpu.memory_space<vmem>>, vector<1x256xf32>
      tpu.vector_store %arg6[%c0_26, %c0_27], %71 {strides = array<i32>} : memref<1x256xf32, #tpu.memory_space<vmem>>, vector<1x256xf32>,
    } else {
    }
    %true = arith.constant true
    %57 = arith.xori %54, %true : i1
    %58 = arith.extui %57 : i1 to i32
    %c0_i32_19 = arith.constant 0 : i32
    %59 = arith.cmpi ne, %58, %c0_i32_19 : i32
    scf.if %59 {
      %c0_22 = arith.constant 0 : index
      %c0_23 = arith.constant 0 : index
      %63 = vector.load %arg6[%c0_22, %c0_23] : memref<1x256xf32, #tpu.memory_space<vmem>>, vector<1x256xf32>
      %64 = arith.addf %63, %49 : vector<1x256xf32>
      %c0_24 = arith.constant 0 : index
      %c0_25 = arith.constant 0 : index
      %65 = vector.load %arg6[%c0_24, %c0_25] : memref<1x256xf32, #tpu.memory_space<vmem>>, vector<1x256xf32>
      tpu.vector_store %arg6[%c0_24, %c0_25], %64 {strides = array<i32>} : memref<1x256xf32, #tpu.memory_space<vmem>>, vector<1x256xf32>,
    } else {
    }
    %c0_i32_20 = arith.constant 0 : i32
    %60 = arith.cmpi eq, %arg1, %c0_i32_20 : i32
    %61 = arith.extui %60 : i1 to i32
    %c0_i32_21 = arith.constant 0 : i32
    %62 = arith.cmpi ne, %61, %c0_i32_21 : i32
    scf.if %62 {
      %c0_22 = arith.constant 0 : index
      %c0_23 = arith.constant 0 : index
      %63 = vector.load %arg6[%c0_22, %c0_23] : memref<1x256xf32, #tpu.memory_space<vmem>>, vector<1x256xf32>
      %cst_24 = arith.constant dense<0.000000e+00> : vector<1xf32>
      %64 = vector.multi_reduction <add>, %63, %cst_24 [1] : vector<1x256xf32> to vector<1xf32>
      %65 = vector.shape_cast %64 : vector<1xf32> to vector<1x1xf32>
      %66 = vector.shape_cast %65 : vector<1x1xf32> to vector<1x1xf32>
      %67 = vector.broadcast %66 : vector<1x1xf32> to vector<8x128xf32>
      %c0_25 = arith.constant 0 : index
      %c0_26 = arith.constant 0 : index
      %68 = vector.load %arg5[%c0_25, %c0_26] : memref<8x128xf32, #tpu.memory_space<vmem>>, vector<8x128xf32>
      tpu.vector_store %arg5[%c0_25, %c0_26], %67 {strides = array<i32>} : memref<8x128xf32, #tpu.memory_space<vmem>>, vector<8x128xf32>,
    } else {
    }
    return
  }
  func.func @transform_0(%arg0: i32, %arg1: i32) -> (i32, i32) {
    %c0_i32 = arith.constant 0 : i32
    %c0_i32_0 = arith.constant 0 : i32
    %c0_i32_1 = arith.constant 0 : i32
    return %c0_i32, %c0_i32_0 : i32, i32
  }
  func.func @transform_1(%arg0: i32, %arg1: i32) -> (i32, i32) {
    %c1_i32 = arith.constant 1 : i32
    %0 = arith.muli %arg0, %c1_i32 : i32
    %1 = arith.addi %0, %arg1 : i32
    %c0_i32 = arith.constant 0 : i32
    %c0_i32_0 = arith.constant 0 : i32
    return %c0_i32, %1 : i32, i32
  }
  func.func @transform_2(%arg0: i32, %arg1: i32) -> (i32, i32) {
    %c1_i32 = arith.constant 1 : i32
    %0 = arith.muli %arg0, %c1_i32 : i32
    %1 = arith.addi %0, %arg1 : i32
    %c0_i32 = arith.constant 0 : i32
    %c0_i32_0 = arith.constant 0 : i32
    return %c0_i32, %1 : i32, i32
  }
  func.func @transform_3(%arg0: i32, %arg1: i32) -> (i32, i32) {
    %c0_i32 = arith.constant 0 : i32
    %c0_i32_0 = arith.constant 0 : i32
    return %arg0, %c0_i32 : i32, i32
  }
}

</mosaic_0001>

<llo_original>
// kernel: global_glance_loss.1
$region0: #{global_glance_loss.1}
  #allocation0 [shape = 'u32[]', space=smem, size = 0x4, offset = 0x4, fixed_abs, tag = 'smem constant byte address 0x4 - core index']
  #allocation1 [shape = 'u32[72,128]{1,0:T(1,128)}', space=vmem, size = 0x9000, scoped, tag = 'internal scratch']
  #allocation2 [shape = 'f32[1,256]{1,0:T(1,128)}', space=vmem, size = 0x400, scoped, tag = 'scratch operand']
  %s0 = inlined_call_operand.vmem [shape: f32[16,1], index: 0, kind: input, shape index: {}]
  %s1 = inlined_call_operand.vmem [shape: f32[16,512], index: 1, kind: input, shape index: {}]
  %s2 = inlined_call_operand.vmem [shape: f32[16,512], index: 2, kind: input, shape index: {}]
  %s3 = inlined_call_operand.vmem [shape: f32[16,128], index: 3, kind: output, shape index: {}]
  %s4 = sld [smem:[#allocation0]]
  $region107: #{global_glance_loss.1} parent=0
    _
  %s6 = ssub.s32 1, %s4
  %s7 = scalar_select 0, %s6, %s4
  $region1: #{global_glance_loss.1} parent=0
    #allocation3 [shape = 'u8[32768]{0}', space=vmem, size = 0x8000, scoped, tag = 'input window, operand 1']
    #allocation4 [shape = 'u8[32768]{0}', space=vmem, size = 0x8000, scoped, tag = 'input window, operand 2']
    loop: start=0, step=1, limit=4
    $region2: #{global_glance_loss.1} parent=1 // loop_pre_header
      _
    $region3: #{global_glance_loss.1} parent=1 // loop_header
      %s9 = sphi 0, %s13
      %p10 = scmp.ge.s32.totalorder %s9, 4
      %s16 = sphi 0, %s28
      %s17 = sphi 0, %s24
      %s18 = sphi 0, %s16
      %s19 = sphi 0, %s17
      %s20 = sphi 0, %s18
      %s21 = sphi 0, %s19
      %s29 = sphi 0, %s29
      %s31 = sphi 0, %s29
      %s32 = sphi 0, %s31
      %s46 = sphi 0, %s32
      %s54 = sphi 0, %s56
      %s57 = sphi 0, %s54
      %s58 = sphi 0, %s57
      %s74 = sphi 0, %s58
      %s82 = sphi 0, %s84
      %s85 = sphi 0, %s82
      %s86 = sphi 0, %s85
      %s102 = sphi 0, %s86
      %s108 = sphi 0, %s110
      %s111 = sphi 0, %s108
      %s112 = sphi 0, %s111
      %s128 = sphi 0, %s112
    $region4: #{global_glance_loss.1} parent=1 // loop_header_branch
      %12 = sbr.rel (%p10) target = $region8
    $region5: #{global_glance_loss.1} parent=1 // loop_body
      %s14 = ssub.s32 %s9, 1
      %s15 = ssub.s32 %s9, 2
      %s22 = sadd.s32 1, %s17
      %p23 = scmp.ge.s32.totalorder %s22, 1
      %s24 = scalar_select %p23, 0, %s22
      %s25 = sadd.s32 1, %s16
      %s26 = scalar_select %p23, %s25, %s16
      %p27 = scmp.ge.s32.totalorder %s26, 2
      %s28 = scalar_select %p27, 0, %s26
      %s30 = sadd.s32 %s29, 1
      %p33 = scmp.eq.s32.totalorder %s9, 1
      %p34 = scmp.ne.s32.totalorder %s29, %s31
      %p35 = scmp.eq.s32.totalorder %s9, 0
      %p36 = por %p34, %p35
      %p37 = scmp.ne.s32.totalorder %s29, %s31
      %p38 = scmp.eq.s32.totalorder %s14, 1
      %p39 = por %p37, %p38
      %p40 = scmp.ne.s32.totalorder %s31, %s32
      %p41 = scmp.eq.s32.totalorder %s14, 0
      %p42 = por %p40, %p41
      %p43 = scmp.ne.s32.totalorder %s31, %s32
      %p44 = scmp.eq.s32.totalorder %s15, 1
      %p45 = por %p43, %p44
      %p47 = scmp.ne.s32.totalorder %s32, %s46
      %p48 = scmp.eq.s32.totalorder %s15, 0
      %p49 = por %p47, %p48
      %s50 = sadd.s32 %s16, %s17
      %s51 = sadd.s32 %s28, %s24
      %s52 = ssub.s32 %s50, %s51
      %p53 = scmp.eq.s32.totalorder %s52, 0
      %s55 = sadd.s32 %s54, 1
      %s56 = scalar_select %p53, %s54, %s55
      %p59 = pneg %p53
      %p60 = scmp.eq.s32.totalorder %s9, 1
      %p61 = por %p59, %p60
      %p62 = scmp.ne.s32.totalorder %s54, %s57
      %p63 = scmp.eq.s32.totalorder %s9, 0
      %p64 = por %p62, %p63
      %p65 = scmp.ne.s32.totalorder %s54, %s57
      %p66 = scmp.eq.s32.totalorder %s14, 1
      %p67 = por %p65, %p66
      %p68 = scmp.ne.s32.totalorder %s57, %s58
      %p69 = scmp.eq.s32.totalorder %s14, 0
      %p70 = por %p68, %p69
      %p71 = scmp.ne.s32.totalorder %s57, %s58
      %p72 = scmp.eq.s32.totalorder %s15, 1
      %p73 = por %p71, %p72
      %p75 = scmp.ne.s32.totalorder %s58, %s74
      %p76 = scmp.eq.s32.totalorder %s15, 0
      %p77 = por %p75, %p76
      %s78 = sadd.s32 %s16, %s17
      %s79 = sadd.s32 %s28, %s24
      %s80 = ssub.s32 %s78, %s79
      %p81 = scmp.eq.s32.totalorder %s80, 0
      %s83 = sadd.s32 %s82, 1
      %s84 = scalar_select %p81, %s82, %s83
      %p87 = pneg %p81
      %p88 = scmp.eq.s32.totalorder %s9, 1
      %p89 = por %p87, %p88
      %p90 = scmp.ne.s32.totalorder %s82, %s85
      %p91 = scmp.eq.s32.totalorder %s9, 0
      %p92 = por %p90, %p91
      %p93 = scmp.ne.s32.totalorder %s82, %s85
      %p94 = scmp.eq.s32.totalorder %s14, 1
      %p95 = por %p93, %p94
      %p96 = scmp.ne.s32.totalorder %s85, %s86
      %p97 = scmp.eq.s32.totalorder %s14, 0
      %p98 = por %p96, %p97
      %p99 = scmp.ne.s32.totalorder %s85, %s86
      %p100 = scmp.eq.s32.totalorder %s15, 1
      %p101 = por %p99, %p100
      %p103 = scmp.ne.s32.totalorder %s86, %s102
      %p104 = scmp.eq.s32.totalorder %s15, 0
      %p105 = por %p103, %p104
      %s106 = ssub.s32 %s16, %s28
      %p107 = scmp.eq.s32.totalorder %s106, 0
      %s109 = sadd.s32 %s108, 1
      %s110 = scalar_select %p107, %s108, %s109
      %p113 = pneg %p107
      %p114 = scmp.eq.s32.totalorder %s9, 1
      %p115 = por %p113, %p114
      %p116 = scmp.ne.s32.totalorder %s108, %s111
      %p117 = scmp.eq.s32.totalorder %s9, 0
      %p118 = por %p116, %p117
      %p119 = scmp.ne.s32.totalorder %s108, %s111
      %p120 = scmp.eq.s32.totalorder %s14, 1
      %p121 = por %p119, %p120
      %p122 = scmp.ne.s32.totalorder %s111, %s112
      %p123 = scmp.eq.s32.totalorder %s14, 0
      %p124 = por %p122, %p123
      %p125 = scmp.ne.s32.totalorder %s111, %s112
      %p126 = scmp.eq.s32.totalorder %s15, 1
      %p127 = por %p125, %p126
      %p129 = scmp.ne.s32.totalorder %s112, %s128
      %p130 = scmp.eq.s32.totalorder %s15, 0
      %p131 = por %p129, %p130
      %p132 = scmp.le.s32.totalorder 1, %s9
      %p133 = scmp.lt.s32.totalorder %s9, 3
      %p134 = pnand %p132, %p133
      %p135 = pneg %p134
      // Predicated region
      $region9: #{global_glance_loss.1} parent=5 // pred_check
        _
      $region10: #{global_glance_loss.1} parent=5 // pred_check_branch
        %137 = sbr.rel (%p134) target = $region12
      $region11: #{global_glance_loss.1} parent=5 // pred_region
        %s138 = ssub.s32 %s9, 1
        // Predicated region
        $region13: #{global_glance_loss.1} parent=11 // pred_check
          %p139 = pneg %p42
        $region14: #{global_glance_loss.1} parent=11 // pred_check_branch
          %141 = sbr.rel (%p139) target = $region16
        $region15: #{global_glance_loss.1} parent=11 // pred_region
          _
        $region16: #{global_glance_loss.1} parent=11 // pred_fallthru
          _
      $region12: #{global_glance_loss.1} parent=5 // pred_fallthru
        _
      %p142 = scmp.lt.s32.totalorder %s9, 2
      // Predicated region
      $region17: #{global_glance_loss.1} parent=5 // pred_check
        %p143 = pneg %p142
      $region18: #{global_glance_loss.1} parent=5 // pred_check_branch
        %145 = sbr.rel (%p143) target = $region20
      $region19: #{global_glance_loss.1} parent=5 // pred_region
        // Predicated region
        $region21: #{global_glance_loss.1} parent=19 // pred_check
          %p146 = pneg %p64
        $region22: #{global_glance_loss.1} parent=19 // pred_check_branch
          %148 = sbr.rel (%p146) target = $region24
        $region23: #{global_glance_loss.1} parent=19 // pred_region
          %s149 = sand.u32 %s54, 1
          %s150 = sand.u32 %s54, 1
          %s151 = smul.addr %s150, 32
          %s152 = scalar_lea.vmem [#allocation3], %s151
          %s153 = sadd.s32 %s16, %s17
          %s154 = smul.u32 2, %s153
          %s155 = smul.addr %s154, 8
          %s156 = scalar_lea.vmem %s1, %s155
          // Predicated region
          $region25: #{global_glance_loss.1} parent=23 // pred_check
            _
          $region26: #{global_glance_loss.1} parent=23 // pred_check_branch
            %158 = sbr.rel (0) target = $region28
          $region27: #{global_glance_loss.1} parent=23 // pred_region
            // Predicated region
            $region29: #{global_glance_loss.1} parent=27 // pred_check
              _
            $region30: #{global_glance_loss.1} parent=27 // pred_check_branch
              %160 = sbr.rel (0) target = $region32
            $region31: #{global_glance_loss.1} parent=27 // pred_region
              loop: start=0, step=1, limit=1
              $region33: #{global_glance_loss.1} parent=31 // loop_pre_header
                _
              $region34: #{global_glance_loss.1} parent=31 // loop_header
                %s162 = sphi 0, %s166
                %p163 = scmp.ge.s32.totalorder %s162, 1
                %s167 = sphi %s156, %s156
                %s168 = sphi %s152, %s152
              $region35: #{global_glance_loss.1} parent=31 // loop_header_branch
                %165 = sbr.rel (%p163) target = $region39
              $region36: #{global_glance_loss.1} parent=31 // loop_body
                %v169 = vld [vmem:[%s167] sm:$0xff]
                %170 = vst [vmem:[%s168] sm:$0xff] %v169
                %v171 = vld [vmem:[%s167 + $0x8] sm:$0xff]
                %172 = vst [vmem:[%s168 + $0x8] sm:$0xff] %v171
                %v173 = vld [vmem:[%s167 + $0x20] sm:$0xff]
                %174 = vst [vmem:[%s168 + $0x10] sm:$0xff] %v173
                %v175 = vld [vmem:[%s167 + $0x28] sm:$0xff]
                %176 = vst [vmem:[%s168 + $0x18] sm:$0xff] %v175
              $region37: #{global_glance_loss.1} parent=31 // loop_footer
                %s166 = sadd.s32 1, %s162
              $region38: #{global_glance_loss.1} parent=31 // loop_footer_branch
                %161 = sbr.rel target = $region34
              $region39: #{global_glance_loss.1} parent=31 // loop_exit
                _
            $region32: #{global_glance_loss.1} parent=27 // pred_fallthru
              _
            // Predicated region
            $region40: #{global_glance_loss.1} parent=27 // pred_check
              _
            $region41: #{global_glance_loss.1} parent=27 // pred_check_branch
              %178 = sbr.rel target = $region43
            $region42: #{global_glance_loss.1} parent=27 // pred_region
              _
            $region43: #{global_glance_loss.1} parent=27 // pred_fallthru
              _
          $region28: #{global_glance_loss.1} parent=23 // pred_fallthru
            _
          %179 = vnop
        $region24: #{global_glance_loss.1} parent=19 // pred_fallthru
          _
        // Predicated region
        $region44: #{global_glance_loss.1} parent=19 // pred_check
          %p180 = pneg %p92
        $region45: #{global_glance_loss.1} parent=19 // pred_check_branch
          %182 = sbr.rel (%p180) target = $region47
        $region46: #{global_glance_loss.1} parent=19 // pred_region
          %s183 = sand.u32 %s82, 1
          %s184 = sand.u32 %s82, 1
          %s185 = smul.addr %s184, 32
          %s186 = scalar_lea.vmem [#allocation4], %s185
          %s187 = sadd.s32 %s16, %s17
          %s188 = smul.u32 2, %s187
          %s189 = smul.addr %s188, 8
          %s190 = scalar_lea.vmem %s2, %s189
          // Predicated region
          $region48: #{global_glance_loss.1} parent=46 // pred_check
            _
          $region49: #{global_glance_loss.1} parent=46 // pred_check_branch
            %192 = sbr.rel (0) target = $region51
          $region50: #{global_glance_loss.1} parent=46 // pred_region
            // Predicated region
            $region52: #{global_glance_loss.1} parent=50 // pred_check
              _
            $region53: #{global_glance_loss.1} parent=50 // pred_check_branch
              %194 = sbr.rel (0) target = $region55
            $region54: #{global_glance_loss.1} parent=50 // pred_region
              loop: start=0, step=1, limit=1
              $region56: #{global_glance_loss.1} parent=54 // loop_pre_header
                _
              $region57: #{global_glance_loss.1} parent=54 // loop_header
                %s196 = sphi 0, %s200
                %p197 = scmp.ge.s32.totalorder %s196, 1
                %s201 = sphi %s190, %s190
                %s202 = sphi %s186, %s186
              $region58: #{global_glance_loss.1} parent=54 // loop_header_branch
                %199 = sbr.rel (%p197) target = $region62
              $region59: #{global_glance_loss.1} parent=54 // loop_body
                %v203 = vld [vmem:[%s201] sm:$0xff]
                %204 = vst [vmem:[%s202] sm:$0xff] %v203
                %v205 = vld [vmem:[%s201 + $0x8] sm:$0xff]
                %206 = vst [vmem:[%s202 + $0x8] sm:$0xff] %v205
                %v207 = vld [vmem:[%s201 + $0x20] sm:$0xff]
                %208 = vst [vmem:[%s202 + $0x10] sm:$0xff] %v207
                %v209 = vld [vmem:[%s201 + $0x28] sm:$0xff]
                %210 = vst [vmem:[%s202 + $0x18] sm:$0xff] %v209
              $region60: #{global_glance_loss.1} parent=54 // loop_footer
                %s200 = sadd.s32 1, %s196
              $region61: #{global_glance_loss.1} parent=54 // loop_footer_branch
                %195 = sbr.rel target = $region57
              $region62: #{global_glance_loss.1} parent=54 // loop_exit
                _
            $region55: #{global_glance_loss.1} parent=50 // pred_fallthru
              _
            // Predicated region
            $region63: #{global_glance_loss.1} parent=50 // pred_check
              _
            $region64: #{global_glance_loss.1} parent=50 // pred_check_branch
              %212 = sbr.rel target = $region66
            $region65: #{global_glance_loss.1} parent=50 // pred_region
              _
            $region66: #{global_glance_loss.1} parent=50 // pred_fallthru
              _
          $region51: #{global_glance_loss.1} parent=46 // pred_fallthru
            _
          %213 = vnop
        $region47: #{global_glance_loss.1} parent=19 // pred_fallthru
          _
      $region20: #{global_glance_loss.1} parent=5 // pred_fallthru
        _
      %p214 = scmp.le.s32.totalorder 1, %s9
      %p215 = scmp.lt.s32.totalorder %s9, 3
      %p216 = pnand %p214, %p215
      %p217 = pneg %p216
      // Predicated region
      $region67: #{global_glance_loss.1} parent=5 // pred_check
        _
      $region68: #{global_glance_loss.1} parent=5 // pred_check_branch
        %219 = sbr.rel (%p216) target = $region70
      $region69: #{global_glance_loss.1} parent=5 // pred_region
        %s220 = ssub.s32 %s9, 1
        %s221 = sand.u32 %s57, 1
        %s222 = sand.u32 %s57, 1
        %s223 = smul.addr %s222, 32
        %s224 = scalar_lea.vmem [#allocation3], %s223
        // Predicated region
        $region71: #{global_glance_loss.1} parent=69 // pred_check
          %p225 = pneg %p70
        $region72: #{global_glance_loss.1} parent=69 // pred_check_branch
          %227 = sbr.rel (%p225) target = $region74
        $region73: #{global_glance_loss.1} parent=69 // pred_region
          _
        $region74: #{global_glance_loss.1} parent=69 // pred_fallthru
          _
        %s228 = sand.u32 %s85, 1
        %s229 = sand.u32 %s85, 1
        %s230 = smul.addr %s229, 32
        %s231 = scalar_lea.vmem [#allocation4], %s230
        // Predicated region
        $region75: #{global_glance_loss.1} parent=69 // pred_check
          %p232 = pneg %p98
        $region76: #{global_glance_loss.1} parent=69 // pred_check_branch
          %234 = sbr.rel (%p232) target = $region78
        $region77: #{global_glance_loss.1} parent=69 // pred_region
          _
        $region78: #{global_glance_loss.1} parent=69 // pred_fallthru
          _
        %p235 = pneg %p42
        %p236 = pneg %p39
        %s237 = sand.u32 %s57, 1
        %s238 = sand.u32 %s57, 1
        %s239 = smul.addr %s238, 32
        %s240 = scalar_lea.vmem [#allocation3], %s239
        %p241 = pneg %p70
        %p242 = pneg %p67
        %s243 = sand.u32 %s85, 1
        %s244 = sand.u32 %s85, 1
        %s245 = smul.addr %s244, 32
        %s246 = scalar_lea.vmem [#allocation4], %s245
        %p247 = pneg %p98
        %p248 = pneg %p95
        %p249 = pneg %p124
        %p250 = pneg %p121
        %p251 = scmp.lt.s32.totalorder %s18, 1
        %s252 = scalar_select %p251, %s18, 1
        %s253 = smul.addr %s252, 8
        %s254 = scalar_lea.vmem %s3, %s253
        %s255 = sadd.s32 %s18, %s19
        %s256 = smul.u32 2, %s255
        %s257 = sadd.s32 %s18, %s19
        %s258 = smul.u32 2, %s257
        %p259 = scmp.lt.s32.totalorder %s18, 1
        %s260 = scalar_select %p259, %s18, 1
        %s261 = smul.addr %s260, 8
        %s262 = scalar_lea.vmem %s3, %s261
        %p263 = scmp.eq.s32.totalorder %s19, 0
        // Predicated region
        $region79: #{global_glance_loss.1} parent=69 // pred_check
          %p264 = pneg %p263
        $region80: #{global_glance_loss.1} parent=69 // pred_check_branch
          %266 = sbr.rel (%p264) target = $region82
        $region81: #{global_glance_loss.1} parent=69 // pred_region
          %v267 = vlaneseq
          %vm268 = vcmp.ge.s32.totalorder %v267, 0
          %vm269 = vcmp.lt.s32.totalorder %v267, 256
          %vm270 = vmand %vm268, %vm269
          %271 = vst.msk [vmem:[#allocation2] sm:$0x3] %vm270, 0.0
          %272 = vst [vmem:[%s262] sm:$0xff] 0.0
        $region82: #{global_glance_loss.1} parent=69 // pred_fallthru
          _
        %v273 = vld [vmem:[%s224] sm:$0xff]
        %v274 = vld [vmem:[%s224 + $0x8] sm:$0xff]
        %v275 = vld [vmem:[%s224 + $0x10] sm:$0xff]
        %v276 = vld [vmem:[%s224 + $0x18] sm:$0xff]
        %v277 = vld [vmem:[%s231] sm:$0xff]
        %v278 = vld [vmem:[%s231 + $0x8] sm:$0xff]
        %v279 = vld [vmem:[%s231 + $0x10] sm:$0xff]
        %v280 = vld [vmem:[%s231 + $0x18] sm:$0xff]
        %v281 = vld [vmem:[%s0] sm:$0xff]
        %v282 = vld [vmem:[%s0 + $0x8] sm:$0xff]
        %284 = vset.pattern.permute.xlu0 0
        %285 = vperm.xlu0 %284, %v281
        %v286 = vpop.permute.xlu0 %285
        %289 = vset.pattern.permute.xlu0 0
        %290 = vperm.xlu0 %289, %v282
        %v291 = vpop.permute.xlu0 %290
        %v293 = vmul.f32 %v273, %v286
        %v294 = vmul.f32 %v274, %v286
        %v295 = vmul.f32 %v275, %v291
        %v296 = vmul.f32 %v276, %v291
        %v297 = vmul.f32 %v277, %v286
        %v298 = vmul.f32 %v278, %v286
        %v299 = vmul.f32 %v279, %v291
        %v300 = vmul.f32 %v280, %v291
        %v301 = vadd.f32 %v293, %v295
        %v302 = vrot.slane %v301, 4
        %v303 = vadd.f32 %v301, %v302
        %v304 = vrot.slane %v303, 2
        %v305 = vadd.f32 %v303, %v304
        %v306 = vrot.slane %v305, 1
        %v307 = vadd.f32 %v305, %v306
        %v308 = vadd.f32 %v294, %v296
        %v309 = vrot.slane %v308, 4
        %v310 = vadd.f32 %v308, %v309
        %v311 = vrot.slane %v310, 2
        %v312 = vadd.f32 %v310, %v311
        %v313 = vrot.slane %v312, 1
        %v314 = vadd.f32 %v312, %v313
        %v315 = vadd.f32 %v297, %v299
        %v316 = vrot.slane %v315, 4
        %v317 = vadd.f32 %v315, %v316
        %v318 = vrot.slane %v317, 2
        %v319 = vadd.f32 %v317, %v318
        %v320 = vrot.slane %v319, 1
        %v321 = vadd.f32 %v319, %v320
        %v322 = vadd.f32 %v298, %v300
        %v323 = vrot.slane %v322, 4
        %v324 = vadd.f32 %v322, %v323
        %v325 = vrot.slane %v324, 2
        %v326 = vadd.f32 %v324, %v325
        %v327 = vrot.slane %v326, 1
        %v328 = vadd.f32 %v326, %v327
        %v329 = vmul.f32 %v273, %v293
        %v330 = vmul.f32 %v274, %v294
        %v331 = vmul.f32 %v275, %v295
        %v332 = vmul.f32 %v276, %v296
        %v333 = vadd.f32 %v329, %v331
        %v334 = vrot.slane %v333, 4
        %v335 = vadd.f32 %v333, %v334
        %v336 = vrot.slane %v335, 2
        %v337 = vadd.f32 %v335, %v336
        %v338 = vrot.slane %v337, 1
        %v339 = vadd.f32 %v337, %v338
        %v340 = vadd.f32 %v330, %v332
        %v341 = vrot.slane %v340, 4
        %v342 = vadd.f32 %v340, %v341
        %v343 = vrot.slane %v342, 2
        %v344 = vadd.f32 %v342, %v343
        %v345 = vrot.slane %v344, 1
        %v346 = vadd.f32 %v344, %v345
        %v347 = vmul.f32 %v307, %v307
        %v348 = vmul.f32 %v314, %v314
        %v349 = vsub.f32 %v339, %v347
        %v350 = vsub.f32 %v346, %v348
        %v351 = vmul.f32 %v277, %v297
        %v352 = vmul.f32 %v278, %v298
        %v353 = vmul.f32 %v279, %v299
        %v354 = vmul.f32 %v280, %v300
        %v355 = vadd.f32 %v351, %v353
        %v356 = vrot.slane %v355, 4
        %v357 = vadd.f32 %v355, %v356
        %v358 = vrot.slane %v357, 2
        %v359 = vadd.f32 %v357, %v358
        %v360 = vrot.slane %v359, 1
        %v361 = vadd.f32 %v359, %v360
        %v362 = vadd.f32 %v352, %v354
        %v363 = vrot.slane %v362, 4
        %v364 = vadd.f32 %v362, %v363
        %v365 = vrot.slane %v364, 2
        %v366 = vadd.f32 %v364, %v365
        %v367 = vrot.slane %v366, 1
        %v368 = vadd.f32 %v366, %v367
        %v369 = vmul.f32 %v321, %v321
        %v370 = vmul.f32 %v328, %v328
        %v371 = vsub.f32 %v361, %v369
        %v372 = vsub.f32 %v368, %v370
        %v373 = vmul.f32 %v277, %v293
        %v374 = vmul.f32 %v278, %v294
        %v375 = vmul.f32 %v279, %v295
        %v376 = vmul.f32 %v280, %v296
        %v377 = vadd.f32 %v373, %v375
        %v378 = vrot.slane %v377, 4
        %v379 = vadd.f32 %v377, %v378
        %v380 = vrot.slane %v379, 2
        %v381 = vadd.f32 %v379, %v380
        %v382 = vrot.slane %v381, 1
        %v383 = vadd.f32 %v381, %v382
        %v384 = vadd.f32 %v374, %v376
        %v385 = vrot.slane %v384, 4
        %v386 = vadd.f32 %v384, %v385
        %v387 = vrot.slane %v386, 2
        %v388 = vadd.f32 %v386, %v387
        %v389 = vrot.slane %v388, 1
        %v390 = vadd.f32 %v388, %v389
        %v391 = vmul.f32 %v307, %v321
        %v392 = vmul.f32 %v314, %v328
        %v393 = vsub.f32 %v383, %v391
        %v394 = vsub.f32 %v390, %v392
        %v395 = vmul.f32 %v307, 2.0
        %v396 = vmul.f32 %v314, 2.0
        %v397 = vmul.f32 %v395, %v321
        %v398 = vmul.f32 %v396, %v328
        %v399 = vadd.f32 %v397, 6.5025
        %v400 = vadd.f32 %v398, 6.5025
        %v401 = vmul.f32 %v393, 2.0
        %v402 = vmul.f32 %v394, 2.0
        %v403 = vadd.f32 %v401, 58.5225
        %v404 = vadd.f32 %v402, 58.5225
        %v405 = vmul.f32 %v399, %v403
        %v406 = vmul.f32 %v400, %v404
        %v407 = vadd.f32 %v347, %v369
        %v408 = vadd.f32 %v348, %v370
        %v409 = vadd.f32 %v407, 6.5025
        %v410 = vadd.f32 %v408, 6.5025
        %v411 = vadd.f32 %v349, %v371
        %v412 = vadd.f32 %v350, %v372
        %v413 = vadd.f32 %v411, 58.5225
        %v414 = vadd.f32 %v412, 58.5225
        %v415 = vmul.f32 %v409, %v413
        %v416 = vmul.f32 %v410, %v414
        %v417 = vrcp.pop %v415
        %v418 = vmul.f32 %v415, %v417
        %v419 = vsub.f32 1.0, %v418
        %v420 = vmul.f32 %v417, %v419
        %v421 = vadd.f32 %v417, %v420
        %vm422 = vweird.f32 %v415
        %vm423 = vweird.f32 %v417
        %vm424 = vmor %vm422, %vm423
        %v425 = vsel %vm424, %v417, %v421
        %v426 = vand.u32 2147483647, %v415
        %vm427 = vcmp.eq.f32.partialorder %v426, 8.507059e+37
        %v428 = vand.u32 %v415, 2147483648
        %v429 = vor.u32 1.1754944e-38, %v428
        %v430 = vsel %vm427, %v429, %v425
        %v431 = vrcp.pop %v416
        %v432 = vmul.f32 %v416, %v431
        %v433 = vsub.f32 1.0, %v432
        %v434 = vmul.f32 %v431, %v433
        %v435 = vadd.f32 %v431, %v434
        %vm436 = vweird.f32 %v416
        %vm437 = vweird.f32 %v431
        %vm438 = vmor %vm436, %vm437
        %v439 = vsel %vm438, %v431, %v435
        %v440 = vand.u32 2147483647, %v416
        %vm441 = vcmp.eq.f32.partialorder %v440, 8.507059e+37
        %v442 = vand.u32 %v416, 2147483648
        %v443 = vor.u32 1.1754944e-38, %v442
        %v444 = vsel %vm441, %v443, %v439
        %v445 = vmul.f32 %v405, %v430
        %v446 = vmul.f32 %v406, %v444
        %s447 = sadd.s32 %s18, %s19
        %s448 = smul.u32 %s447, 256
        %s449 = sadd.s32 %s448, 256
        %p450 = scmp.gt.s32.totalorder %s449, 256
        // Predicated region
        $region83: #{global_glance_loss.1} parent=69 // pred_check
          %p451 = pneg %p450
        $region84: #{global_glance_loss.1} parent=69 // pred_check_branch
          %453 = sbr.rel (%p451) target = $region86
        $region85: #{global_glance_loss.1} parent=69 // pred_region
          %v454 = vlaneseq
          %v455 = vand.u32 %v454, 127
          %v456 = vadd.s32 %v455, 128
          %v457 = vstv %s448
          %v458 = vadd.s32 %v457, %v455
          %v459 = vadd.s32 %v457, %v456
          %v460 = vld [vmem:[#allocation2] sm:$0x3]
          %vm461 = vcmp.lt.s32.totalorder %v458, 256
          %vm462 = vcmp.lt.s32.totalorder %v459, 256
          %v463 = vsel %vm461, %v445, 0.0
          %v464 = vsel %vm462, %v446, 0.0
          %v467 = vrot.slane %v464, 7
          %vm468 = vcmask 1040384
          %v469 = vsel %vm468, %v463, %v467
          %v471 = vadd.f32 %v460, %v469
          %v472 = vlaneseq
          %vm473 = vcmp.ge.s32.totalorder %v472, 0
          %vm474 = vcmp.lt.s32.totalorder %v472, 256
          %vm475 = vmand %vm473, %vm474
          %476 = vst.msk [vmem:[#allocation2] sm:$0x3] %vm475, %v471
        $region86: #{global_glance_loss.1} parent=69 // pred_fallthru
          _
        %p477 = scmp.le.s32.totalorder %s449, 256
        // Predicated region
        $region87: #{global_glance_loss.1} parent=69 // pred_check
          %p478 = pneg %p477
        $region88: #{global_glance_loss.1} parent=69 // pred_check_branch
          %480 = sbr.rel (%p478) target = $region90
        $region89: #{global_glance_loss.1} parent=69 // pred_region
          %v481 = vld [vmem:[#allocation2] sm:$0x3]
          %v484 = vrot.slane %v446, 7
          %vm485 = vcmask 1040384
          %v486 = vsel %vm485, %v445, %v484
          %v488 = vadd.f32 %v481, %v486
          %v489 = vlaneseq
          %vm490 = vcmp.ge.s32.totalorder %v489, 0
          %vm491 = vcmp.lt.s32.totalorder %v489, 256
          %vm492 = vmand %vm490, %vm491
          %493 = vst.msk [vmem:[#allocation2] sm:$0x3] %vm492, %v488
        $region90: #{global_glance_loss.1} parent=69 // pred_fallthru
          _
        // Predicated region
        $region91: #{global_glance_loss.1} parent=69 // pred_check
          %p494 = pneg %p263
        $region92: #{global_glance_loss.1} parent=69 // pred_check_branch
          %496 = sbr.rel (%p494) target = $region94
        $region93: #{global_glance_loss.1} parent=69 // pred_region
          %v497 = vld [vmem:[#allocation2] sm:$0x3]
          %v499 = vperm.slane %v497, 0
          %v500 = vperm.slane %v497, 1
          %vm503 = vcmask 1040384
          %v504 = vsel %vm503, %v499, 0.0
          %v505 = vsel %vm503, %v500, 0.0
          %v506 = vadd.f32 %v504, %v505
          %507 = vadd.xlane.f32.xlu0 %v506
          %v508 = vpop.xlane.xlu0 %507
          %v509 = vperm.slane %v508, 0
          %510 = vst [vmem:[%s262] sm:$0xff] %v509
        $region94: #{global_glance_loss.1} parent=69 // pred_fallthru
          _
        %p511 = scmp.lt.s32.totalorder %s18, 1
        %s512 = scalar_select %p511, %s18, 1
        %s513 = smul.addr %s512, 8
        %s514 = scalar_lea.vmem %s3, %s513
        // Predicated region
        $region95: #{global_glance_loss.1} parent=69 // pred_check
          %p515 = pneg %p121
        $region96: #{global_glance_loss.1} parent=69 // pred_check_branch
          %517 = sbr.rel (%p515) target = $region98
        $region97: #{global_glance_loss.1} parent=69 // pred_region
          _
        $region98: #{global_glance_loss.1} parent=69 // pred_fallthru
          _
      $region70: #{global_glance_loss.1} parent=5 // pred_fallthru
        _
      %p518 = scmp.le.s32.totalorder 2, %s9
      // Predicated region
      $region99: #{global_glance_loss.1} parent=5 // pred_check
        %p519 = pneg %p518
      $region100: #{global_glance_loss.1} parent=5 // pred_check_branch
        %521 = sbr.rel (%p519) target = $region102
      $region101: #{global_glance_loss.1} parent=5 // pred_region
        %s522 = ssub.s32 %s9, 2
        // Predicated region
        $region103: #{global_glance_loss.1} parent=101 // pred_check
          %p523 = pneg %p127
        $region104: #{global_glance_loss.1} parent=101 // pred_check_branch
          %525 = sbr.rel (%p523) target = $region106
        $region105: #{global_glance_loss.1} parent=101 // pred_region
          %p526 = scmp.lt.s32.totalorder %s20, 1
          %s527 = scalar_select %p526, %s20, 1
          %s528 = smul.addr %s527, 8
          %s529 = scalar_lea.vmem %s3, %s528
        $region106: #{global_glance_loss.1} parent=101 // pred_fallthru
          _
      $region102: #{global_glance_loss.1} parent=5 // pred_fallthru
        _
    $region6: #{global_glance_loss.1} parent=1 // loop_footer
      %s13 = sadd.s32 1, %s9
    $region7: #{global_glance_loss.1} parent=1 // loop_footer_branch
      %8 = sbr.rel target = $region3
    $region8: #{global_glance_loss.1} parent=1 // loop_exit
      _

</llo_original>
